<compile_context>
chip_gen: v7x
topology: tpu7x:2x2x1
jax: 0.10.0
libtpu: 0.0.40
codegen_flags: <defaults>
</compile_context>

<pallas_src>
import functools

import jax
import jax.numpy as jnp
from jax import lax
from jax.experimental import pallas as pl
from jax.experimental.pallas import tpu as pltpu

INPUT_DIM = 19
H1, H2, H3 = 100, 500, 100
FINAL = 1

MAX_BATCH_TILE = 512  # rows per grid step (amortizes ~0.35us/step overhead)


def _round_up(n, m):
    return ((n + m - 1) // m) * m


def _mlp_kernel(x_ref, w1_ref, b1_ref, w2_ref, b2_ref, w3_ref, b3_ref,
                w4_ref, b4_ref, o_ref, *, final):
    """One batch-tile of the fused 4-layer MLP. Weights are VMEM-resident."""
    cdt = w1_ref.dtype  # compute (matmul) dtype, e.g. bfloat16

    x = x_ref[...]  # [TB, F_PAD], already in compute dtype

    h = jnp.dot(x, w1_ref[...], preferred_element_type=jnp.float32) + b1_ref[...]
    h = jnp.maximum(h, 0.0).astype(cdt)

    h = jnp.dot(h, w2_ref[...], preferred_element_type=jnp.float32) + b2_ref[...]
    h = jnp.maximum(h, 0.0).astype(cdt)

    h = jnp.dot(h, w3_ref[...], preferred_element_type=jnp.float32) + b3_ref[...]
    h = jnp.maximum(h, 0.0).astype(cdt)

    logits = jnp.dot(h, w4_ref[...], preferred_element_type=jnp.float32) + b4_ref[...]

    if final == 1:
        # sigmoid via tanh -> EUP slot, numerically clean (no exp overflow).
        o_ref[...] = 0.5 * (1.0 + jnp.tanh(0.5 * logits))
    else:
        # Softmax over the real (unpadded) classes only.
        col = lax.broadcasted_iota(jnp.int32, logits.shape, 1)
        logits = jnp.where(col < final, logits, -jnp.inf)
        m = jnp.max(logits, axis=1, keepdims=True)
        e = jnp.exp(logits - m)
        o_ref[...] = e * pl.reciprocal(jnp.sum(e, axis=1, keepdims=True),
                                       approx=False)


def init_params(key, input_dim=INPUT_DIM, final=FINAL):
    """Deterministic init mimicking nn.Linear's U(-1/sqrt(fan_in), 1/sqrt(fan_in)).

    Weights returned as [in, out] f32; biases as [1, out] f32 (unpadded).
    """
    dims = [(input_dim, H1), (H1, H2), (H2, H3), (H3, final)]
    params = []
    for (fan_in, fan_out) in dims:
        key, kw, kb = jax.random.split(key, 3)
        bound = 1.0 / jnp.sqrt(fan_in)
        w = jax.random.uniform(kw, (fan_in, fan_out), jnp.float32, -bound, bound)
        b = jax.random.uniform(kb, (1, fan_out), jnp.float32, -bound, bound)
        params += [w, b]
    return tuple(params)


def prepare_params(params, *, compute_dtype=jnp.bfloat16):
    """Zero-pad weights/biases to vreg-friendly shapes and cast matmul operands.

    W1 -> (32,128), W2 -> (128,512), W3 -> (512,128), W4 -> (128,128) in
    `compute_dtype`; biases padded to matching widths, kept f32.
    Padding is mathematically inert (zero rows/cols, zero bias).
    """
    w1, b1, w2, b2, w3, b3, w4, b4 = params
    f_pad = _round_up(w1.shape[0], 32)
    h1_pad = _round_up(w1.shape[1], 128)
    h2_pad = _round_up(w2.shape[1], 128)
    h3_pad = _round_up(w3.shape[1], 128)
    out_pad = _round_up(w4.shape[1], 128)

    def pad_w(w, rows, cols):
        return jnp.pad(w, ((0, rows - w.shape[0]),
                           (0, cols - w.shape[1]))).astype(compute_dtype)

    def pad_b(b, cols):
        return jnp.pad(b, ((0, 0), (0, cols - b.shape[1]))).astype(jnp.float32)

    return (pad_w(w1, f_pad, h1_pad), pad_b(b1, h1_pad),
            pad_w(w2, h1_pad, h2_pad), pad_b(b2, h2_pad),
            pad_w(w3, h2_pad, h3_pad), pad_b(b3, h3_pad),
            pad_w(w4, h3_pad, out_pad), pad_b(b4, out_pad))


def simple_forward(x, padded_params, *, final=FINAL, max_tile=MAX_BATCH_TILE):
    """x: [B, INPUT_DIM] f32 -> [B, final] f32 probabilities."""
    w1, b1, w2, b2, w3, b3, w4, b4 = padded_params
    batch, feat = x.shape
    f_pad = w1.shape[0]
    out_pad = w4.shape[1]
    compute_dtype = w1.dtype

    # Batch tile: multiple of 8, capped at max_tile; pad batch up to a multiple.
    tile = min(max_tile, _round_up(batch, 8))
    b_pad = _round_up(batch, tile)
    grid = (b_pad // tile,)

    # Pad batch + features, cast matmul operand to compute dtype (halves x DMA).
    xp = jnp.pad(x, ((0, b_pad - batch), (0, f_pad - feat))).astype(compute_dtype)

    weight_elems = sum(int(p.size) for p in (w1, w2, w3, w4))
    flops = 2 * b_pad * (w1.shape[0] * w1.shape[1] + w2.shape[0] * w2.shape[1]
                         + w3.shape[0] * w3.shape[1] + w4.shape[0] * w4.shape[1])
    bytes_accessed = (int(xp.size) * jnp.dtype(compute_dtype).itemsize
                      + weight_elems * jnp.dtype(compute_dtype).itemsize
                      + sum(int(b.size) for b in (b1, b2, b3, b4)) * 4
                      + b_pad * out_pad * 4)
    cost = pl.CostEstimate(flops=flops,
                           transcendentals=b_pad * out_pad,
                           bytes_accessed=bytes_accessed)

    def resident(p):  # whole array, same block every grid step -> stays in VMEM
        return pl.BlockSpec(p.shape, lambda i: (0, 0))

    out = pl.pallas_call(
        functools.partial(_mlp_kernel, final=final),
        out_shape=jax.ShapeDtypeStruct((b_pad, out_pad), jnp.float32),
        grid=grid,
        in_specs=[
            pl.BlockSpec((tile, f_pad), lambda i: (i, 0)),
            resident(w1), resident(b1),
            resident(w2), resident(b2),
            resident(w3), resident(b3),
            resident(w4), resident(b4),
        ],
        out_specs=pl.BlockSpec((tile, out_pad), lambda i: (i, 0)),
        compiler_params=pltpu.CompilerParams(
            dimension_semantics=("parallel",),
            vmem_limit_bytes=32 << 20),
        cost_estimate=cost,
    )(xp, w1, b1, w2, b2, w3, b3, w4, b4)

    return out[:batch, :final]


def reference_forward(x, params, *, final=FINAL):
    """Plain-JAX f32 reference (matches the PyTorch module semantics)."""
    w1, b1, w2, b2, w3, b3, w4, b4 = params
    h = jnp.maximum(x @ w1 + b1, 0.0)
    h = jnp.maximum(h @ w2 + b2, 0.0)
    h = jnp.maximum(h @ w3 + b3, 0.0)
    logits = h @ w4 + b4
    if final == 1:
        return jax.nn.sigmoid(logits)
    return jax.nn.softmax(logits, axis=1)


def reference_forward_like_kernel(x, padded_params, *, final=FINAL):
    """Plain-JAX reference using the kernel's exact numerical scheme (bf16 matmuls)."""
    w1, b1, w2, b2, w3, b3, w4, b4 = padded_params
    cdt = w1.dtype
    f_pad = w1.shape[0]
    xp = jnp.pad(x, ((0, 0), (0, f_pad - x.shape[1]))).astype(cdt)
    h = jnp.dot(xp, w1, preferred_element_type=jnp.float32) + b1
    h = jnp.maximum(h, 0.0).astype(cdt)
    h = jnp.dot(h, w2, preferred_element_type=jnp.float32) + b2
    h = jnp.maximum(h, 0.0).astype(cdt)
    h = jnp.dot(h, w3, preferred_element_type=jnp.float32) + b3
    h = jnp.maximum(h, 0.0).astype(cdt)
    logits = jnp.dot(h, w4, preferred_element_type=jnp.float32) + b4
    if final == 1:
        probs = 0.5 * (1.0 + jnp.tanh(0.5 * logits))
    else:
        col = lax.broadcasted_iota(jnp.int32, logits.shape, 1)
        probs = jax.nn.softmax(jnp.where(col < final, logits, -jnp.inf), axis=1)
    return probs[:, :final]


if __name__ == "__main__":
    key = jax.random.PRNGKey(0)
    key, kx = jax.random.split(key)

    batch = 8
    x = jax.random.normal(kx, (batch, INPUT_DIM), jnp.float32)
    params = init_params(key)
    pparams = prepare_params(params)  # padded + bf16 matmul operands

    out = jax.block_until_ready(simple_forward(x, pparams))
    assert out.shape == (batch, FINAL), out.shape

    # Tight check against a reference that uses the identical numerical scheme.
    ref_exact = reference_forward_like_kernel(x, pparams)
    err_exact = jnp.max(jnp.abs(out - ref_exact))
    assert jnp.allclose(out, ref_exact, atol=1e-4, rtol=1e-4), f"max abs err {err_exact}"

    # Loose check against the full-f32 PyTorch-equivalent reference
    # (difference is only bf16 matmul rounding).
    ref_f32 = reference_forward(x, params)
    err_f32 = jnp.max(jnp.abs(out - ref_f32))
    assert jnp.allclose(out, ref_f32, atol=5e-2), f"max abs err vs f32 ref {err_f32}"

    print("KERNEL_OK")
</pallas_src>

<mosaic_0001>
module attributes {stable_mosaic.version = 11 : i64} {
  func.func @_mlp_kernel(%arg0: i32, %arg1: memref<8x32xbf16, #tpu.memory_space<vmem>>, %arg2: memref<32x128xbf16, #tpu.memory_space<vmem>>, %arg3: memref<1x128xf32, #tpu.memory_space<vmem>>, %arg4: memref<128x512xbf16, #tpu.memory_space<vmem>>, %arg5: memref<1x512xf32, #tpu.memory_space<vmem>>, %arg6: memref<512x128xbf16, #tpu.memory_space<vmem>>, %arg7: memref<1x128xf32, #tpu.memory_space<vmem>>, %arg8: memref<128x128xbf16, #tpu.memory_space<vmem>>, %arg9: memref<1x128xf32, #tpu.memory_space<vmem>>, %arg10: memref<8x128xf32, #tpu.memory_space<vmem>>) attributes {dimension_semantics = [#tpu.dimension_semantics<parallel>], iteration_bounds = array<i64: 1>, scalar_prefetch = 0 : i64, scratch_operands = 0 : i64, tpu.core_type = #tpu.core_type<tc>, window_params = [{transform_indices = @transform_0, window_bounds = array<i64: 8, 32>}, {pipeline_mode = #tpu.pipeline_mode<synchronous>, transform_indices = @transform_1, window_bounds = array<i64: 32, 128>}, {pipeline_mode = #tpu.pipeline_mode<synchronous>, transform_indices = @transform_2, window_bounds = array<i64: 1, 128>}, {pipeline_mode = #tpu.pipeline_mode<synchronous>, transform_indices = @transform_3, window_bounds = array<i64: 128, 512>}, {pipeline_mode = #tpu.pipeline_mode<synchronous>, transform_indices = @transform_4, window_bounds = array<i64: 1, 512>}, {pipeline_mode = #tpu.pipeline_mode<synchronous>, transform_indices = @transform_5, window_bounds = array<i64: 512, 128>}, {pipeline_mode = #tpu.pipeline_mode<synchronous>, transform_indices = @transform_6, window_bounds = array<i64: 1, 128>}, {pipeline_mode = #tpu.pipeline_mode<synchronous>, transform_indices = @transform_7, window_bounds = array<i64: 128, 128>}, {pipeline_mode = #tpu.pipeline_mode<synchronous>, transform_indices = @transform_8, window_bounds = array<i64: 1, 128>}, {transform_indices = @transform_9, window_bounds = array<i64: 8, 128>}]} {
    %c0 = arith.constant 0 : index
    %c0_0 = arith.constant 0 : index
    %0 = vector.load %arg1[%c0, %c0_0] : memref<8x32xbf16, #tpu.memory_space<vmem>>, vector<8x32xbf16>
    %c0_1 = arith.constant 0 : index
    %c0_2 = arith.constant 0 : index
    %1 = vector.load %arg2[%c0_1, %c0_2] : memref<32x128xbf16, #tpu.memory_space<vmem>>, vector<32x128xbf16>
    %cst = arith.constant dense<0.000000e+00> : vector<8x128xf32>
    %2 = tpu.matmul %0, %1, %cst {dimension_numbers = #tpu.dot_dimension_numbers<[1], [0], [0], [1], [0, 0, 1, 1], [], []>} : vector<8x32xbf16>, vector<32x128xbf16>, vector<8x128xf32> -> vector<8x128xf32>
    %c0_3 = arith.constant 0 : index
    %c0_4 = arith.constant 0 : index
    %3 = vector.load %arg3[%c0_3, %c0_4] : memref<1x128xf32, #tpu.memory_space<vmem>>, vector<1x128xf32>
    %4 = vector.broadcast %3 : vector<1x128xf32> to vector<8x128xf32>
    %5 = arith.addf %2, %4 : vector<8x128xf32>
    %cst_5 = arith.constant 0.000000e+00 : f32
    %6 = vector.broadcast %cst_5 : f32 to vector<8x128xf32>
    %7 = arith.maximumf %5, %6 : vector<8x128xf32>
    %8 = arith.truncf %7 : vector<8x128xf32> to vector<8x128xbf16>
    %c0_6 = arith.constant 0 : index
    %c0_7 = arith.constant 0 : index
    %9 = vector.load %arg4[%c0_6, %c0_7] : memref<128x512xbf16, #tpu.memory_space<vmem>>, vector<128x512xbf16>
    %cst_8 = arith.constant dense<0.000000e+00> : vector<8x512xf32>
    %10 = tpu.matmul %8, %9, %cst_8 {dimension_numbers = #tpu.dot_dimension_numbers<[1], [0], [0], [1], [0, 0, 1, 1], [], []>} : vector<8x128xbf16>, vector<128x512xbf16>, vector<8x512xf32> -> vector<8x512xf32>
    %c0_9 = arith.constant 0 : index
    %c0_10 = arith.constant 0 : index
    %11 = vector.load %arg5[%c0_9, %c0_10] : memref<1x512xf32, #tpu.memory_space<vmem>>, vector<1x512xf32>
    %12 = vector.broadcast %11 : vector<1x512xf32> to vector<8x512xf32>
    %13 = arith.addf %10, %12 : vector<8x512xf32>
    %cst_11 = arith.constant 0.000000e+00 : f32
    %14 = vector.broadcast %cst_11 : f32 to vector<8x512xf32>
    %15 = arith.maximumf %13, %14 : vector<8x512xf32>
    %16 = arith.truncf %15 : vector<8x512xf32> to vector<8x512xbf16>
    %c0_12 = arith.constant 0 : index
    %c0_13 = arith.constant 0 : index
    %17 = vector.load %arg6[%c0_12, %c0_13] : memref<512x128xbf16, #tpu.memory_space<vmem>>, vector<512x128xbf16>
    %cst_14 = arith.constant dense<0.000000e+00> : vector<8x128xf32>
    %18 = tpu.matmul %16, %17, %cst_14 {dimension_numbers = #tpu.dot_dimension_numbers<[1], [0], [0], [1], [0, 0, 1, 1], [], []>} : vector<8x512xbf16>, vector<512x128xbf16>, vector<8x128xf32> -> vector<8x128xf32>
    %c0_15 = arith.constant 0 : index
    %c0_16 = arith.constant 0 : index
    %19 = vector.load %arg7[%c0_15, %c0_16] : memref<1x128xf32, #tpu.memory_space<vmem>>, vector<1x128xf32>
    %20 = vector.broadcast %19 : vector<1x128xf32> to vector<8x128xf32>
    %21 = arith.addf %18, %20 : vector<8x128xf32>
    %cst_17 = arith.constant 0.000000e+00 : f32
    %22 = vector.broadcast %cst_17 : f32 to vector<8x128xf32>
    %23 = arith.maximumf %21, %22 : vector<8x128xf32>
    %24 = arith.truncf %23 : vector<8x128xf32> to vector<8x128xbf16>
    %c0_18 = arith.constant 0 : index
    %c0_19 = arith.constant 0 : index
    %25 = vector.load %arg8[%c0_18, %c0_19] : memref<128x128xbf16, #tpu.memory_space<vmem>>, vector<128x128xbf16>
    %cst_20 = arith.constant dense<0.000000e+00> : vector<8x128xf32>
    %26 = tpu.matmul %24, %25, %cst_20 {dimension_numbers = #tpu.dot_dimension_numbers<[1], [0], [0], [1], [0, 0, 1, 1], [], []>} : vector<8x128xbf16>, vector<128x128xbf16>, vector<8x128xf32> -> vector<8x128xf32>
    %c0_21 = arith.constant 0 : index
    %c0_22 = arith.constant 0 : index
    %27 = vector.load %arg9[%c0_21, %c0_22] : memref<1x128xf32, #tpu.memory_space<vmem>>, vector<1x128xf32>
    %28 = vector.broadcast %27 : vector<1x128xf32> to vector<8x128xf32>
    %29 = arith.addf %26, %28 : vector<8x128xf32>
    %cst_23 = arith.constant 5.000000e-01 : f32
    %30 = vector.broadcast %cst_23 : f32 to vector<8x128xf32>
    %31 = arith.mulf %30, %29 : vector<8x128xf32>
    %32 = math.tanh %31 : vector<8x128xf32>
    %cst_24 = arith.constant 1.000000e+00 : f32
    %33 = vector.broadcast %cst_24 : f32 to vector<8x128xf32>
    %34 = arith.addf %33, %32 : vector<8x128xf32>
    %cst_25 = arith.constant 5.000000e-01 : f32
    %35 = vector.broadcast %cst_25 : f32 to vector<8x128xf32>
    %36 = arith.mulf %35, %34 : vector<8x128xf32>
    %c0_26 = arith.constant 0 : index
    %c0_27 = arith.constant 0 : index
    %37 = vector.load %arg10[%c0_26, %c0_27] : memref<8x128xf32, #tpu.memory_space<vmem>>, vector<8x128xf32>
    tpu.vector_store %arg10[%c0_26, %c0_27], %36 {strides = array<i32>} : memref<8x128xf32, #tpu.memory_space<vmem>>, vector<8x128xf32>,
    return
  }
  func.func @transform_0(%arg0: i32) -> (i32, i32) {
    %c0_i32 = arith.constant 0 : i32
    %c0_i32_0 = arith.constant 0 : i32
    return %arg0, %c0_i32 : i32, i32
  }
  func.func @transform_1(%arg0: i32) -> (i32, i32) {
    %c0_i32 = arith.constant 0 : i32
    %c0_i32_0 = arith.constant 0 : i32
    %c0_i32_1 = arith.constant 0 : i32
    return %c0_i32, %c0_i32_0 : i32, i32
  }
  func.func @transform_2(%arg0: i32) -> (i32, i32) {
    %c0_i32 = arith.constant 0 : i32
    %c0_i32_0 = arith.constant 0 : i32
    %c0_i32_1 = arith.constant 0 : i32
    return %c0_i32, %c0_i32_0 : i32, i32
  }
  func.func @transform_3(%arg0: i32) -> (i32, i32) {
    %c0_i32 = arith.constant 0 : i32
    %c0_i32_0 = arith.constant 0 : i32
    %c0_i32_1 = arith.constant 0 : i32
    return %c0_i32, %c0_i32_0 : i32, i32
  }
  func.func @transform_4(%arg0: i32) -> (i32, i32) {
    %c0_i32 = arith.constant 0 : i32
    %c0_i32_0 = arith.constant 0 : i32
    %c0_i32_1 = arith.constant 0 : i32
    return %c0_i32, %c0_i32_0 : i32, i32
  }
  func.func @transform_5(%arg0: i32) -> (i32, i32) {
    %c0_i32 = arith.constant 0 : i32
    %c0_i32_0 = arith.constant 0 : i32
    %c0_i32_1 = arith.constant 0 : i32
    return %c0_i32, %c0_i32_0 : i32, i32
  }
  func.func @transform_6(%arg0: i32) -> (i32, i32) {
    %c0_i32 = arith.constant 0 : i32
    %c0_i32_0 = arith.constant 0 : i32
    %c0_i32_1 = arith.constant 0 : i32
    return %c0_i32, %c0_i32_0 : i32, i32
  }
  func.func @transform_7(%arg0: i32) -> (i32, i32) {
    %c0_i32 = arith.constant 0 : i32
    %c0_i32_0 = arith.constant 0 : i32
    %c0_i32_1 = arith.constant 0 : i32
    return %c0_i32, %c0_i32_0 : i32, i32
  }
  func.func @transform_8(%arg0: i32) -> (i32, i32) {
    %c0_i32 = arith.constant 0 : i32
    %c0_i32_0 = arith.constant 0 : i32
    %c0_i32_1 = arith.constant 0 : i32
    return %c0_i32, %c0_i32_0 : i32, i32
  }
  func.func @transform_9(%arg0: i32) -> (i32, i32) {
    %c0_i32 = arith.constant 0 : i32
    %c0_i32_0 = arith.constant 0 : i32
    return %arg0, %c0_i32 : i32, i32
  }
}

</mosaic_0001>

<llo_original>
// kernel: tpu_custom_call.1
$region0: #{tpu_custom_call.1}
  #allocation0 [shape = 'u32[]', space=smem, size = 0x4, offset = 0x4, fixed_abs, tag = 'smem constant byte address 0x4 - core index']
  #allocation1 [shape = 'u32[144,128]{1,0:T(1,128)}', space=vmem, size = 0x12000, scoped, tag = 'internal scratch']
  %s0 = inlined_call_operand.hbm [shape: bf16[8,32], index: 0, kind: input, shape index: {}]
  %s1 = inlined_call_operand.hbm [shape: bf16[32,128], index: 1, kind: input, shape index: {}]
  %s2 = inlined_call_operand.vmem [shape: f32[1,128], index: 2, kind: input, shape index: {}]
  %s3 = inlined_call_operand.hbm [shape: bf16[128,512], index: 3, kind: input, shape index: {}]
  %s4 = inlined_call_operand.vmem [shape: f32[1,512], index: 4, kind: input, shape index: {}]
  %s5 = inlined_call_operand.hbm [shape: bf16[512,128], index: 5, kind: input, shape index: {}]
  %s6 = inlined_call_operand.vmem [shape: f32[1,128], index: 6, kind: input, shape index: {}]
  %s7 = inlined_call_operand.hbm [shape: bf16[128,128], index: 7, kind: input, shape index: {}]
  %s8 = inlined_call_operand.vmem [shape: f32[1,128], index: 8, kind: input, shape index: {}]
  %s9 = inlined_call_operand.hbm [shape: f32[8,128], index: 9, kind: output, shape index: {}]
  %s10 = sld [smem:[#allocation0]]
  $region66: #{tpu_custom_call.1} parent=0
    _
  %s12 = ssub.s32 1, %s10
  %s13 = scalar_select 0, %s12, %s10
  $region1: #{tpu_custom_call.1} parent=0
    #allocation2 [shape = 'u8[2048]{0}', space=vmem, size = 0x800, scoped, tag = 'input window, operand 0, single buffered']
    #allocation3 [shape = 's32[1]{0}', space=sflag, size = 0x4, scoped, tag = 'scoped memory for tpu_custom_call.1']
    #allocation4 [shape = 's32[1]{0}', space=sflag, size = 0x4, scoped, tag = 'scoped memory for tpu_custom_call.1']
    #allocation5 [shape = 'u8[8192]{0}', space=vmem, size = 0x2000, scoped, tag = 'input window, operand 1, single buffered']
    #allocation6 [shape = 's32[1]{0}', space=sflag, size = 0x4, scoped, tag = 'scoped memory for tpu_custom_call.1']
    #allocation7 [shape = 'u8[131072]{0}', space=vmem, size = 0x20000, scoped, tag = 'input window, operand 3, single buffered']
    #allocation8 [shape = 'u8[131072]{0}', space=vmem, size = 0x20000, scoped, tag = 'input window, operand 5, single buffered']
    #allocation9 [shape = 's32[1]{0}', space=sflag, size = 0x4, scoped, tag = 'scoped memory for tpu_custom_call.1']
    #allocation10 [shape = 'u8[32768]{0}', space=vmem, size = 0x8000, scoped, tag = 'input window, operand 7, single buffered']
    #allocation11 [shape = 'u8[4096]{0}', space=vmem, size = 0x1000, scoped, tag = 'output window, operand 0, single buffered']
    %14 = vsyncpa [#allocation3], 0
    %15 = vsyncpa [#allocation6], 0
    %16 = vsyncpa [#allocation9], 0
    %17 = vsyncpa [#allocation4], 0
    // Predicated region
    $region2: #{tpu_custom_call.1} parent=1 // pred_check
      _
    $region3: #{tpu_custom_call.1} parent=1 // pred_check_branch
      %19 = sbr.rel (0) target = $region5
    $region4: #{tpu_custom_call.1} parent=1 // pred_region
      %s21 = ssub.s32 64, 64
      %22 = vsyncadd [#allocation3], %s21
      %s24 = sshll.u32 [#allocation2], 4
      %s25 = int_to_ptr.vmem [resolvable:$true] %s24
      %27 = dma.hbm_to_vmem [thread:$0]  %s0, 64, %s25, [#allocation3]
    $region5: #{tpu_custom_call.1} parent=1 // pred_fallthru
      _
    // Predicated region
    $region6: #{tpu_custom_call.1} parent=1 // pred_check
      _
    $region7: #{tpu_custom_call.1} parent=1 // pred_check_branch
      %29 = sbr.rel (0) target = $region9
    $region8: #{tpu_custom_call.1} parent=1 // pred_region
      %s31 = ssub.s32 256, 256
      %32 = vsyncadd [#allocation6], %s31
      %s33 = sshll.u32 [#allocation5], 4
      %s34 = int_to_ptr.vmem [resolvable:$true] %s33
      %39 = dma.hbm_to_vmem [thread:$0]  %s1, 256, %s34, [#allocation6], 64, 64, 4
    $region9: #{tpu_custom_call.1} parent=1 // pred_fallthru
      _
    // Predicated region
    $region10: #{tpu_custom_call.1} parent=1 // pred_check
      _
    $region11: #{tpu_custom_call.1} parent=1 // pred_check_branch
      %41 = sbr.rel (0) target = $region13
    $region12: #{tpu_custom_call.1} parent=1 // pred_region
      _
    $region13: #{tpu_custom_call.1} parent=1 // pred_fallthru
      _
    // Predicated region
    $region14: #{tpu_custom_call.1} parent=1 // pred_check
      _
    $region15: #{tpu_custom_call.1} parent=1 // pred_check_branch
      %43 = sbr.rel (0) target = $region17
    $region16: #{tpu_custom_call.1} parent=1 // pred_region
      %s45 = ssub.s32 4096, 4096
      %46 = vsyncadd [#allocation6], %s45
      %s47 = sshll.u32 [#allocation7], 4
      %s48 = int_to_ptr.vmem [resolvable:$true] %s47
      %53 = dma.hbm_to_vmem [thread:$0]  %s3, 4096, %s48, [#allocation6], 256, 256, 16
    $region17: #{tpu_custom_call.1} parent=1 // pred_fallthru
      _
    // Predicated region
    $region18: #{tpu_custom_call.1} parent=1 // pred_check
      _
    $region19: #{tpu_custom_call.1} parent=1 // pred_check_branch
      %55 = sbr.rel (0) target = $region21
    $region20: #{tpu_custom_call.1} parent=1 // pred_region
      _
    $region21: #{tpu_custom_call.1} parent=1 // pred_fallthru
      _
    // Predicated region
    $region22: #{tpu_custom_call.1} parent=1 // pred_check
      _
    $region23: #{tpu_custom_call.1} parent=1 // pred_check_branch
      %57 = sbr.rel (0) target = $region25
    $region24: #{tpu_custom_call.1} parent=1 // pred_region
      %s59 = ssub.s32 4096, 4096
      %60 = vsyncadd [#allocation9], %s59
      %s61 = sshll.u32 [#allocation8], 4
      %s62 = int_to_ptr.vmem [resolvable:$true] %s61
      %67 = dma.hbm_to_vmem [thread:$0]  %s5, 4096, %s62, [#allocation9], 64, 64, 4
    $region25: #{tpu_custom_call.1} parent=1 // pred_fallthru
      _
    // Predicated region
    $region26: #{tpu_custom_call.1} parent=1 // pred_check
      _
    $region27: #{tpu_custom_call.1} parent=1 // pred_check_branch
      %69 = sbr.rel (0) target = $region29
    $region28: #{tpu_custom_call.1} parent=1 // pred_region
      _
    $region29: #{tpu_custom_call.1} parent=1 // pred_fallthru
      _
    // Predicated region
    $region30: #{tpu_custom_call.1} parent=1 // pred_check
      _
    $region31: #{tpu_custom_call.1} parent=1 // pred_check_branch
      %71 = sbr.rel (0) target = $region33
    $region32: #{tpu_custom_call.1} parent=1 // pred_region
      %s73 = ssub.s32 1024, 1024
      %74 = vsyncadd [#allocation9], %s73
      %s75 = sshll.u32 [#allocation10], 4
      %s76 = int_to_ptr.vmem [resolvable:$true] %s75
      %81 = dma.hbm_to_vmem [thread:$0]  %s7, 1024, %s76, [#allocation9], 64, 64, 4
    $region33: #{tpu_custom_call.1} parent=1 // pred_fallthru
      _
    // Predicated region
    $region34: #{tpu_custom_call.1} parent=1 // pred_check
      _
    $region35: #{tpu_custom_call.1} parent=1 // pred_check_branch
      %83 = sbr.rel (0) target = $region37
    $region36: #{tpu_custom_call.1} parent=1 // pred_region
      _
    $region37: #{tpu_custom_call.1} parent=1 // pred_fallthru
      _
    // Predicated region
    $region38: #{tpu_custom_call.1} parent=1 // pred_check
      _
    $region39: #{tpu_custom_call.1} parent=1 // pred_check_branch
      %85 = sbr.rel (0) target = $region41
    $region40: #{tpu_custom_call.1} parent=1 // pred_region
      %86 = dma.done [#allocation3], 64
    $region41: #{tpu_custom_call.1} parent=1 // pred_fallthru
      _
    // Predicated region
    $region42: #{tpu_custom_call.1} parent=1 // pred_check
      _
    $region43: #{tpu_custom_call.1} parent=1 // pred_check_branch
      %88 = sbr.rel (0) target = $region45
    $region44: #{tpu_custom_call.1} parent=1 // pred_region
      %89 = dma.done [#allocation6], 256
    $region45: #{tpu_custom_call.1} parent=1 // pred_fallthru
      _
    // Predicated region
    $region46: #{tpu_custom_call.1} parent=1 // pred_check
      _
    $region47: #{tpu_custom_call.1} parent=1 // pred_check_branch
      %91 = sbr.rel (0) target = $region49
    $region48: #{tpu_custom_call.1} parent=1 // pred_region
      %92 = dma.done [#allocation6], 4096
    $region49: #{tpu_custom_call.1} parent=1 // pred_fallthru
      _
    // Predicated region
    $region50: #{tpu_custom_call.1} parent=1 // pred_check
      _
    $region51: #{tpu_custom_call.1} parent=1 // pred_check_branch
      %94 = sbr.rel (0) target = $region53
    $region52: #{tpu_custom_call.1} parent=1 // pred_region
      %95 = dma.done [#allocation9], 4096
    $region53: #{tpu_custom_call.1} parent=1 // pred_fallthru
      _
    // Predicated region
    $region54: #{tpu_custom_call.1} parent=1 // pred_check
      _
    $region55: #{tpu_custom_call.1} parent=1 // pred_check_branch
      %97 = sbr.rel (0) target = $region57
    $region56: #{tpu_custom_call.1} parent=1 // pred_region
      %98 = dma.done [#allocation9], 1024
    $region57: #{tpu_custom_call.1} parent=1 // pred_fallthru
      _
    %v100 = vld [vmem:[#allocation2] sm:$0xf]
    %v101 = vld [vmem:[#allocation5] sm:$0xf]
    %v102 = vld [vmem:[#allocation5 + $0x4] sm:$0xf]
    %v103 = vld [vmem:[#allocation5 + $0x8] sm:$0xf]
    %v104 = vld [vmem:[#allocation5 + $0xc] sm:$0xf]
    %v105 = vld [vmem:[%s2] sm:$0x1]
    %v107 = vlaneseq
    %v108 = vshrl.u32 %v107, 7
    %v109 = vsub.s32 0, %v108
    %v110 = vrot.slane %v105, %v109
    %v116 = vunpack.c.l.b16 %v101
    %v117 = vunpack.c.l.b16 %v102
    %v118 = vunpack.c.l.b16 %v103
    %v119 = vunpack.c.l.b16 %v104
    %v120 = vpack.c.b16 %v117, %v116
    %v121 = vpack.c.b16 %v119, %v118
    %vm124 = vcmask 261120
    %v126 = vsel %vm124, %v100, 0
    %128 = vmatprep.subr.bf16.mxu0 0
    %129 = vmatpush1.bf16.msra.mxu0 %v120
    %130 = vmatprep.subr.bf16.mxu0 0
    %131 = vmatpush1.bf16.msra.mxu0 %v121
    %132 = vmatprep.subr.bf16.mxu0 0
    %133 = vmatpush1.bf16.msra.mxu0 0
    %134 = vmatprep.subr.bf16.mxu0 0
    %135 = vmatpush1.bf16.msra.mxu0 0
    %136 = vmatprep.subr.bf16.mxu0 0
    %137 = vmatpush1.bf16.msra.mxu0 0
    %138 = vmatprep.subr.bf16.mxu0 0
    %139 = vmatpush1.bf16.msra.mxu0 0
    %140 = vmatprep.subr.bf16.mxu0 0
    %141 = vmatpush1.bf16.msra.mxu0 0
    %142 = vmatprep.subr.bf16.mxu0 0
    %143 = vmatpush1.bf16.msra.mxu0 0
    %144 = vmatprep.subr.bf16.mxu0 0
    %145 = vmatpush1.bf16.msra.mxu0 0
    %146 = vmatprep.subr.bf16.mxu0 0
    %147 = vmatpush1.bf16.msra.mxu0 0
    %148 = vmatprep.subr.bf16.mxu0 0
    %149 = vmatpush1.bf16.msra.mxu0 0
    %150 = vmatprep.subr.bf16.mxu0 0
    %151 = vmatpush1.bf16.msra.mxu0 0
    %152 = vmatprep.subr.bf16.mxu0 0
    %153 = vmatpush1.bf16.msra.mxu0 0
    %154 = vmatprep.subr.bf16.mxu0 0
    %155 = vmatpush1.bf16.msra.mxu0 0
    %156 = vmatprep.subr.bf16.mxu0 0
    %157 = vmatpush1.bf16.msra.mxu0 0
    %158 = vmatprep.subr.bf16.mxu0 0
    %159 = vmatpush1.bf16.msra.mxu0 0
    %160 = vmatprep.mubr.bf16.mxu0 0
    %161 = vmatmul.mubr.bf16.gmra.mrb[0].mxu0 %v126
    %v162 = vpop.f32.mrb[0].mxu0
    %v163 = vadd.f32 %v110, %v162
    %v164 = vpop.f32.mrb[0].mxu0
    %v165 = vpop.f32.mrb[0].mxu0
    %v166 = vpop.f32.mrb[0].mxu0
    %167 = vdwg.mxu0
    %v168 = vmax.f32 %v163, 0.0
    %v169 = vpack.c.bf16 %v168, %v168
    %v170 = vld [vmem:[#allocation7] sm:$0xff]
    %v171 = vld [vmem:[#allocation7 + $0x8] sm:$0xff]
    %v172 = vld [vmem:[#allocation7 + $0x10] sm:$0xff]
    %v173 = vld [vmem:[#allocation7 + $0x18] sm:$0xff]
    %v174 = vld [vmem:[#allocation7 + $0x20] sm:$0xff]
    %v175 = vld [vmem:[#allocation7 + $0x28] sm:$0xff]
    %v176 = vld [vmem:[#allocation7 + $0x30] sm:$0xff]
    %v177 = vld [vmem:[#allocation7 + $0x38] sm:$0xff]
    %v178 = vld [vmem:[#allocation7 + $0x40] sm:$0xff]
    %v179 = vld [vmem:[#allocation7 + $0x48] sm:$0xff]
    %v180 = vld [vmem:[#allocation7 + $0x50] sm:$0xff]
    %v181 = vld [vmem:[#allocation7 + $0x58] sm:$0xff]
    %v182 = vld [vmem:[#allocation7 + $0x60] sm:$0xff]
    %v183 = vld [vmem:[#allocation7 + $0x68] sm:$0xff]
    %v184 = vld [vmem:[#allocation7 + $0x70] sm:$0xff]
    %v185 = vld [vmem:[#allocation7 + $0x78] sm:$0xff]
    %v186 = vld [vmem:[#allocation7 + $0x80] sm:$0xff]
    %v187 = vld [vmem:[#allocation7 + $0x88] sm:$0xff]
    %v188 = vld [vmem:[#allocation7 + $0x90] sm:$0xff]
    %v189 = vld [vmem:[#allocation7 + $0x98] sm:$0xff]
    %v190 = vld [vmem:[#allocation7 + $0xa0] sm:$0xff]
    %v191 = vld [vmem:[#allocation7 + $0xa8] sm:$0xff]
    %v192 = vld [vmem:[#allocation7 + $0xb0] sm:$0xff]
    %v193 = vld [vmem:[#allocation7 + $0xb8] sm:$0xff]
    %v194 = vld [vmem:[#allocation7 + $0xc0] sm:$0xff]
    %v195 = vld [vmem:[#allocation7 + $0xc8] sm:$0xff]
    %v196 = vld [vmem:[#allocation7 + $0xd0] sm:$0xff]
    %v197 = vld [vmem:[#allocation7 + $0xd8] sm:$0xff]
    %v198 = vld [vmem:[#allocation7 + $0xe0] sm:$0xff]
    %v199 = vld [vmem:[#allocation7 + $0xe8] sm:$0xff]
    %v200 = vld [vmem:[#allocation7 + $0xf0] sm:$0xff]
    %v201 = vld [vmem:[#allocation7 + $0xf8] sm:$0xff]
    %v202 = vld [vmem:[%s4] sm:$0xf]
    %v204 = vlaneseq
    %v205 = vshrl.u32 %v204, 7
    %v206 = vsub.s32 0, %v205
    %v207 = vrot.slane %v202, %v206
    %v208 = vlaneseq
    %v209 = vshrl.u32 %v208, 7
    %v210 = vsub.s32 1, %v209
    %v211 = vrot.slane %v202, %v210
    %v212 = vlaneseq
    %v213 = vshrl.u32 %v212, 7
    %v214 = vsub.s32 2, %v213
    %v215 = vrot.slane %v202, %v214
    %v216 = vlaneseq
    %v217 = vshrl.u32 %v216, 7
    %v218 = vsub.s32 3, %v217
    %v219 = vrot.slane %v202, %v218
    %v256 = vunpack.c.l.b16 %v170
    %v257 = vunpack.c.h.b16 %v170
    %v258 = vunpack.c.l.b16 %v171
    %v259 = vunpack.c.h.b16 %v171
    %v260 = vunpack.c.l.b16 %v172
    %v261 = vunpack.c.h.b16 %v172
    %v262 = vunpack.c.l.b16 %v173
    %v263 = vunpack.c.h.b16 %v173
    %v264 = vunpack.c.l.b16 %v174
    %v265 = vunpack.c.h.b16 %v174
    %v266 = vunpack.c.l.b16 %v175
    %v267 = vunpack.c.h.b16 %v175
    %v268 = vunpack.c.l.b16 %v176
    %v269 = vunpack.c.h.b16 %v176
    %v270 = vunpack.c.l.b16 %v177
    %v271 = vunpack.c.h.b16 %v177
    %v272 = vunpack.c.l.b16 %v178
    %v273 = vunpack.c.h.b16 %v178
    %v274 = vunpack.c.l.b16 %v179
    %v275 = vunpack.c.h.b16 %v179
    %v276 = vunpack.c.l.b16 %v180
    %v277 = vunpack.c.h.b16 %v180
    %v278 = vunpack.c.l.b16 %v181
    %v279 = vunpack.c.h.b16 %v181
    %v280 = vunpack.c.l.b16 %v182
    %v281 = vunpack.c.h.b16 %v182
    %v282 = vunpack.c.l.b16 %v183
    %v283 = vunpack.c.h.b16 %v183
    %v284 = vunpack.c.l.b16 %v184
    %v285 = vunpack.c.h.b16 %v184
    %v286 = vunpack.c.l.b16 %v185
    %v287 = vunpack.c.h.b16 %v185
    %v288 = vunpack.c.l.b16 %v186
    %v289 = vunpack.c.h.b16 %v186
    %v290 = vunpack.c.l.b16 %v187
    %v291 = vunpack.c.h.b16 %v187
    %v292 = vunpack.c.l.b16 %v188
    %v293 = vunpack.c.h.b16 %v188
    %v294 = vunpack.c.l.b16 %v189
    %v295 = vunpack.c.h.b16 %v189
    %v296 = vunpack.c.l.b16 %v190
    %v297 = vunpack.c.h.b16 %v190
    %v298 = vunpack.c.l.b16 %v191
    %v299 = vunpack.c.h.b16 %v191
    %v300 = vunpack.c.l.b16 %v192
    %v301 = vunpack.c.h.b16 %v192
    %v302 = vunpack.c.l.b16 %v193
    %v303 = vunpack.c.h.b16 %v193
    %v304 = vunpack.c.l.b16 %v194
    %v305 = vunpack.c.h.b16 %v194
    %v306 = vunpack.c.l.b16 %v195
    %v307 = vunpack.c.h.b16 %v195
    %v308 = vunpack.c.l.b16 %v196
    %v309 = vunpack.c.h.b16 %v196
    %v310 = vunpack.c.l.b16 %v197
    %v311 = vunpack.c.h.b16 %v197
    %v312 = vunpack.c.l.b16 %v198
    %v313 = vunpack.c.h.b16 %v198
    %v314 = vunpack.c.l.b16 %v199
    %v315 = vunpack.c.h.b16 %v199
    %v316 = vunpack.c.l.b16 %v200
    %v317 = vunpack.c.h.b16 %v200
    %v318 = vunpack.c.l.b16 %v201
    %v319 = vunpack.c.h.b16 %v201
    %v320 = vpack.c.b16 %v260, %v256
    %v321 = vpack.c.b16 %v261, %v257
    %v322 = vpack.c.b16 %v262, %v258
    %v323 = vpack.c.b16 %v263, %v259
    %v324 = vpack.c.b16 %v268, %v264
    %v325 = vpack.c.b16 %v269, %v265
    %v326 = vpack.c.b16 %v270, %v266
    %v327 = vpack.c.b16 %v271, %v267
    %v328 = vpack.c.b16 %v276, %v272
    %v329 = vpack.c.b16 %v277, %v273
    %v330 = vpack.c.b16 %v278, %v274
    %v331 = vpack.c.b16 %v279, %v275
    %v332 = vpack.c.b16 %v284, %v280
    %v333 = vpack.c.b16 %v285, %v281
    %v334 = vpack.c.b16 %v286, %v282
    %v335 = vpack.c.b16 %v287, %v283
    %v336 = vpack.c.b16 %v292, %v288
    %v337 = vpack.c.b16 %v293, %v289
    %v338 = vpack.c.b16 %v294, %v290
    %v339 = vpack.c.b16 %v295, %v291
    %v340 = vpack.c.b16 %v300, %v296
    %v341 = vpack.c.b16 %v301, %v297
    %v342 = vpack.c.b16 %v302, %v298
    %v343 = vpack.c.b16 %v303, %v299
    %v344 = vpack.c.b16 %v308, %v304
    %v345 = vpack.c.b16 %v309, %v305
    %v346 = vpack.c.b16 %v310, %v306
    %v347 = vpack.c.b16 %v311, %v307
    %v348 = vpack.c.b16 %v316, %v312
    %v349 = vpack.c.b16 %v317, %v313
    %v350 = vpack.c.b16 %v318, %v314
    %v351 = vpack.c.b16 %v319, %v315
    %384 = vmatprep.subr.bf16.mxu0 %v321
    %385 = vmatpush1.bf16.msra.mxu0 %v320
    %386 = vmatprep.subr.bf16.mxu0 %v325
    %387 = vmatpush1.bf16.msra.mxu0 %v324
    %388 = vmatprep.subr.bf16.mxu0 %v329
    %389 = vmatpush1.bf16.msra.mxu0 %v328
    %390 = vmatprep.subr.bf16.mxu0 %v333
    %391 = vmatpush1.bf16.msra.mxu0 %v332
    %392 = vmatprep.subr.bf16.mxu0 %v337
    %393 = vmatpush1.bf16.msra.mxu0 %v336
    %394 = vmatprep.subr.bf16.mxu0 %v341
    %395 = vmatpush1.bf16.msra.mxu0 %v340
    %396 = vmatprep.subr.bf16.mxu0 %v345
    %397 = vmatpush1.bf16.msra.mxu0 %v344
    %398 = vmatprep.subr.bf16.mxu0 %v349
    %399 = vmatpush1.bf16.msra.mxu0 %v348
    %400 = vmatprep.subr.bf16.mxu0 0
    %401 = vmatpush1.bf16.msra.mxu0 0
    %402 = vmatprep.subr.bf16.mxu0 0
    %403 = vmatpush1.bf16.msra.mxu0 0
    %404 = vmatprep.subr.bf16.mxu0 0
    %405 = vmatpush1.bf16.msra.mxu0 0
    %406 = vmatprep.subr.bf16.mxu0 0
    %407 = vmatpush1.bf16.msra.mxu0 0
    %408 = vmatprep.subr.bf16.mxu0 0
    %409 = vmatpush1.bf16.msra.mxu0 0
    %410 = vmatprep.subr.bf16.mxu0 0
    %411 = vmatpush1.bf16.msra.mxu0 0
    %412 = vmatprep.subr.bf16.mxu0 0
    %413 = vmatpush1.bf16.msra.mxu0 0
    %414 = vmatprep.subr.bf16.mxu0 0
    %415 = vmatpush1.bf16.msra.mxu0 0
    %416 = vmatprep.mubr.bf16.mxu0 0
    %417 = vmatmul.mubr.bf16.gmra.mrb[0].mxu0 %v169
    %v418 = vpop.f32.mrb[0].mxu0
    %v419 = vadd.f32 %v207, %v418
    %v420 = vpop.f32.mrb[0].mxu0
    %v421 = vadd.f32 %v211, %v420
    %v422 = vpop.f32.mrb[0].mxu0
    %v423 = vpop.f32.mrb[0].mxu0
    %424 = vdwg.mxu0
    %425 = vmatprep.subr.bf16.mxu0 %v323
    %426 = vmatpush1.bf16.msra.mxu0 %v322
    %427 = vmatprep.subr.bf16.mxu0 %v327
    %428 = vmatpush1.bf16.msra.mxu0 %v326
    %429 = vmatprep.subr.bf16.mxu0 %v331
    %430 = vmatpush1.bf16.msra.mxu0 %v330
    %431 = vmatprep.subr.bf16.mxu0 %v335
    %432 = vmatpush1.bf16.msra.mxu0 %v334
    %433 = vmatprep.subr.bf16.mxu0 %v339
    %434 = vmatpush1.bf16.msra.mxu0 %v338
    %435 = vmatprep.subr.bf16.mxu0 %v343
    %436 = vmatpush1.bf16.msra.mxu0 %v342
    %437 = vmatprep.subr.bf16.mxu0 %v347
    %438 = vmatpush1.bf16.msra.mxu0 %v346
    %439 = vmatprep.subr.bf16.mxu0 %v351
    %440 = vmatpush1.bf16.msra.mxu0 %v350
    %441 = vmatprep.subr.bf16.mxu0 0
    %442 = vmatpush1.bf16.msra.mxu0 0
    %443 = vmatprep.subr.bf16.mxu0 0
    %444 = vmatpush1.bf16.msra.mxu0 0
    %445 = vmatprep.subr.bf16.mxu0 0
    %446 = vmatpush1.bf16.msra.mxu0 0
    %447 = vmatprep.subr.bf16.mxu0 0
    %448 = vmatpush1.bf16.msra.mxu0 0
    %449 = vmatprep.subr.bf16.mxu0 0
    %450 = vmatpush1.bf16.msra.mxu0 0
    %451 = vmatprep.subr.bf16.mxu0 0
    %452 = vmatpush1.bf16.msra.mxu0 0
    %453 = vmatprep.subr.bf16.mxu0 0
    %454 = vmatpush1.bf16.msra.mxu0 0
    %455 = vmatprep.subr.bf16.mxu0 0
    %456 = vmatpush1.bf16.msra.mxu0 0
    %457 = vmatprep.mubr.bf16.mxu0 0
    %458 = vmatmul.mubr.bf16.gmra.mrb[0].mxu0 %v169
    %v459 = vpop.f32.mrb[0].mxu0
    %v460 = vadd.f32 %v215, %v459
    %v461 = vpop.f32.mrb[0].mxu0
    %v462 = vadd.f32 %v219, %v461
    %v463 = vpop.f32.mrb[0].mxu0
    %v464 = vpop.f32.mrb[0].mxu0
    %465 = vdwg.mxu0
    %v466 = vmax.f32 %v419, 0.0
    %v467 = vmax.f32 %v421, 0.0
    %v468 = vmax.f32 %v460, 0.0
    %v469 = vmax.f32 %v462, 0.0
    %v470 = vpack.c.bf16 %v466, %v466
    %v471 = vpack.c.bf16 %v467, %v467
    %v472 = vpack.c.bf16 %v468, %v468
    %v473 = vpack.c.bf16 %v469, %v469
    %v474 = vld [vmem:[#allocation8] sm:$0xf]
    %v475 = vld [vmem:[#allocation8 + $0x4] sm:$0xf]
    %v476 = vld [vmem:[#allocation8 + $0x8] sm:$0xf]
    %v477 = vld [vmem:[#allocation8 + $0xc] sm:$0xf]
    %v478 = vld [vmem:[#allocation8 + $0x10] sm:$0xf]
    %v479 = vld [vmem:[#allocation8 + $0x14] sm:$0xf]
    %v480 = vld [vmem:[#allocation8 + $0x18] sm:$0xf]
    %v481 = vld [vmem:[#allocation8 + $0x1c] sm:$0xf]
    %v482 = vld [vmem:[#allocation8 + $0x20] sm:$0xf]
    %v483 = vld [vmem:[#allocation8 + $0x24] sm:$0xf]
    %v484 = vld [vmem:[#allocation8 + $0x28] sm:$0xf]
    %v485 = vld [vmem:[#allocation8 + $0x2c] sm:$0xf]
    %v486 = vld [vmem:[#allocation8 + $0x30] sm:$0xf]
    %v487 = vld [vmem:[#allocation8 + $0x34] sm:$0xf]
    %v488 = vld [vmem:[#allocation8 + $0x38] sm:$0xf]
    %v489 = vld [vmem:[#allocation8 + $0x3c] sm:$0xf]
    %v490 = vld [vmem:[#allocation8 + $0x40] sm:$0xf]
    %v491 = vld [vmem:[#allocation8 + $0x44] sm:$0xf]
    %v492 = vld [vmem:[#allocation8 + $0x48] sm:$0xf]
    %v493 = vld [vmem:[#allocation8 + $0x4c] sm:$0xf]
    %v494 = vld [vmem:[#allocation8 + $0x50] sm:$0xf]
    %v495 = vld [vmem:[#allocation8 + $0x54] sm:$0xf]
    %v496 = vld [vmem:[#allocation8 + $0x58] sm:$0xf]
    %v497 = vld [vmem:[#allocation8 + $0x5c] sm:$0xf]
    %v498 = vld [vmem:[#allocation8 + $0x60] sm:$0xf]
    %v499 = vld [vmem:[#allocation8 + $0x64] sm:$0xf]
    %v500 = vld [vmem:[#allocation8 + $0x68] sm:$0xf]
    %v501 = vld [vmem:[#allocation8 + $0x6c] sm:$0xf]
    %v502 = vld [vmem:[#allocation8 + $0x70] sm:$0xf]
    %v503 = vld [vmem:[#allocation8 + $0x74] sm:$0xf]
    %v504 = vld [vmem:[#allocation8 + $0x78] sm:$0xf]
    %v505 = vld [vmem:[#allocation8 + $0x7c] sm:$0xf]
    %v506 = vld [vmem:[#allocation8 + $0x80] sm:$0xf]
    %v507 = vld [vmem:[#allocation8 + $0x84] sm:$0xf]
    %v508 = vld [vmem:[#allocation8 + $0x88] sm:$0xf]
    %v509 = vld [vmem:[#allocation8 + $0x8c] sm:$0xf]
    %v510 = vld [vmem:[#allocation8 + $0x90] sm:$0xf]
    %v511 = vld [vmem:[#allocation8 + $0x94] sm:$0xf]
    %v512 = vld [vmem:[#allocation8 + $0x98] sm:$0xf]
    %v513 = vld [vmem:[#allocation8 + $0x9c] sm:$0xf]
    %v514 = vld [vmem:[#allocation8 + $0xa0] sm:$0xf]
    %v515 = vld [vmem:[#allocation8 + $0xa4] sm:$0xf]
    %v516 = vld [vmem:[#allocation8 + $0xa8] sm:$0xf]
    %v517 = vld [vmem:[#allocation8 + $0xac] sm:$0xf]
    %v518 = vld [vmem:[#allocation8 + $0xb0] sm:$0xf]
    %v519 = vld [vmem:[#allocation8 + $0xb4] sm:$0xf]
    %v520 = vld [vmem:[#allocation8 + $0xb8] sm:$0xf]
    %v521 = vld [vmem:[#allocation8 + $0xbc] sm:$0xf]
    %v522 = vld [vmem:[#allocation8 + $0xc0] sm:$0xf]
    %v523 = vld [vmem:[#allocation8 + $0xc4] sm:$0xf]
    %v524 = vld [vmem:[#allocation8 + $0xc8] sm:$0xf]
    %v525 = vld [vmem:[#allocation8 + $0xcc] sm:$0xf]
    %v526 = vld [vmem:[#allocation8 + $0xd0] sm:$0xf]
    %v527 = vld [vmem:[#allocation8 + $0xd4] sm:$0xf]
    %v528 = vld [vmem:[#allocation8 + $0xd8] sm:$0xf]
    %v529 = vld [vmem:[#allocation8 + $0xdc] sm:$0xf]
    %v530 = vld [vmem:[#allocation8 + $0xe0] sm:$0xf]
    %v531 = vld [vmem:[#allocation8 + $0xe4] sm:$0xf]
    %v532 = vld [vmem:[#allocation8 + $0xe8] sm:$0xf]
    %v533 = vld [vmem:[#allocation8 + $0xec] sm:$0xf]
    %v534 = vld [vmem:[#allocation8 + $0xf0] sm:$0xf]
    %v535 = vld [vmem:[#allocation8 + $0xf4] sm:$0xf]
    %v536 = vld [vmem:[#allocation8 + $0xf8] sm:$0xf]
    %v537 = vld [vmem:[#allocation8 + $0xfc] sm:$0xf]
    %v538 = vld [vmem:[%s6] sm:$0x1]
    %v540 = vlaneseq
    %v541 = vshrl.u32 %v540, 7
    %v542 = vsub.s32 0, %v541
    %v543 = vrot.slane %v538, %v542
    %v609 = vunpack.c.l.b16 %v474
    %v610 = vunpack.c.l.b16 %v475
    %v611 = vunpack.c.l.b16 %v476
    %v612 = vunpack.c.l.b16 %v477
    %v613 = vunpack.c.l.b16 %v478
    %v614 = vunpack.c.l.b16 %v479
    %v615 = vunpack.c.l.b16 %v480
    %v616 = vunpack.c.l.b16 %v481
    %v617 = vunpack.c.l.b16 %v482
    %v618 = vunpack.c.l.b16 %v483
    %v619 = vunpack.c.l.b16 %v484
    %v620 = vunpack.c.l.b16 %v485
    %v621 = vunpack.c.l.b16 %v486
    %v622 = vunpack.c.l.b16 %v487
    %v623 = vunpack.c.l.b16 %v488
    %v624 = vunpack.c.l.b16 %v489
    %v625 = vunpack.c.l.b16 %v490
    %v626 = vunpack.c.l.b16 %v491
    %v627 = vunpack.c.l.b16 %v492
    %v628 = vunpack.c.l.b16 %v493
    %v629 = vunpack.c.l.b16 %v494
    %v630 = vunpack.c.l.b16 %v495
    %v631 = vunpack.c.l.b16 %v496
    %v632 = vunpack.c.l.b16 %v497
    %v633 = vunpack.c.l.b16 %v498
    %v634 = vunpack.c.l.b16 %v499
    %v635 = vunpack.c.l.b16 %v500
    %v636 = vunpack.c.l.b16 %v501
    %v637 = vunpack.c.l.b16 %v502
    %v638 = vunpack.c.l.b16 %v503
    %v639 = vunpack.c.l.b16 %v504
    %v640 = vunpack.c.l.b16 %v505
    %v641 = vunpack.c.l.b16 %v506
    %v642 = vunpack.c.l.b16 %v507
    %v643 = vunpack.c.l.b16 %v508
    %v644 = vunpack.c.l.b16 %v509
    %v645 = vunpack.c.l.b16 %v510
    %v646 = vunpack.c.l.b16 %v511
    %v647 = vunpack.c.l.b16 %v512
    %v648 = vunpack.c.l.b16 %v513
    %v649 = vunpack.c.l.b16 %v514
    %v650 = vunpack.c.l.b16 %v515
    %v651 = vunpack.c.l.b16 %v516
    %v652 = vunpack.c.l.b16 %v517
    %v653 = vunpack.c.l.b16 %v518
    %v654 = vunpack.c.l.b16 %v519
    %v655 = vunpack.c.l.b16 %v520
    %v656 = vunpack.c.l.b16 %v521
    %v657 = vunpack.c.l.b16 %v522
    %v658 = vunpack.c.l.b16 %v523
    %v659 = vunpack.c.l.b16 %v524
    %v660 = vunpack.c.l.b16 %v525
    %v661 = vunpack.c.l.b16 %v526
    %v662 = vunpack.c.l.b16 %v527
    %v663 = vunpack.c.l.b16 %v528
    %v664 = vunpack.c.l.b16 %v529
    %v665 = vunpack.c.l.b16 %v530
    %v666 = vunpack.c.l.b16 %v531
    %v667 = vunpack.c.l.b16 %v532
    %v668 = vunpack.c.l.b16 %v533
    %v669 = vunpack.c.l.b16 %v534
    %v670 = vunpack.c.l.b16 %v535
    %v671 = vunpack.c.l.b16 %v536
    %v672 = vunpack.c.l.b16 %v537
    %v673 = vpack.c.b16 %v610, %v609
    %v674 = vpack.c.b16 %v612, %v611
    %v675 = vpack.c.b16 %v614, %v613
    %v676 = vpack.c.b16 %v616, %v615
    %v677 = vpack.c.b16 %v618, %v617
    %v678 = vpack.c.b16 %v620, %v619
    %v679 = vpack.c.b16 %v622, %v621
    %v680 = vpack.c.b16 %v624, %v623
    %v681 = vpack.c.b16 %v626, %v625
    %v682 = vpack.c.b16 %v628, %v627
    %v683 = vpack.c.b16 %v630, %v629
    %v684 = vpack.c.b16 %v632, %v631
    %v685 = vpack.c.b16 %v634, %v633
    %v686 = vpack.c.b16 %v636, %v635
    %v687 = vpack.c.b16 %v638, %v637
    %v688 = vpack.c.b16 %v640, %v639
    %v689 = vpack.c.b16 %v642, %v641
    %v690 = vpack.c.b16 %v644, %v643
    %v691 = vpack.c.b16 %v646, %v645
    %v692 = vpack.c.b16 %v648, %v647
    %v693 = vpack.c.b16 %v650, %v649
    %v694 = vpack.c.b16 %v652, %v651
    %v695 = vpack.c.b16 %v654, %v653
    %v696 = vpack.c.b16 %v656, %v655
    %v697 = vpack.c.b16 %v658, %v657
    %v698 = vpack.c.b16 %v660, %v659
    %v699 = vpack.c.b16 %v662, %v661
    %v700 = vpack.c.b16 %v664, %v663
    %v701 = vpack.c.b16 %v666, %v665
    %v702 = vpack.c.b16 %v668, %v667
    %v703 = vpack.c.b16 %v670, %v669
    %v704 = vpack.c.b16 %v672, %v671
    %737 = vmatprep.subr.bf16.mxu0 0
    %738 = vmatpush1.bf16.msra.mxu0 %v673
    %739 = vmatprep.subr.bf16.mxu0 0
    %740 = vmatpush1.bf16.msra.mxu0 %v674
    %741 = vmatprep.subr.bf16.mxu0 0
    %742 = vmatpush1.bf16.msra.mxu0 %v675
    %743 = vmatprep.subr.bf16.mxu0 0
    %744 = vmatpush1.bf16.msra.mxu0 %v676
    %745 = vmatprep.subr.bf16.mxu0 0
    %746 = vmatpush1.bf16.msra.mxu0 %v677
    %747 = vmatprep.subr.bf16.mxu0 0
    %748 = vmatpush1.bf16.msra.mxu0 %v678
    %749 = vmatprep.subr.bf16.mxu0 0
    %750 = vmatpush1.bf16.msra.mxu0 %v679
    %751 = vmatprep.subr.bf16.mxu0 0
    %752 = vmatpush1.bf16.msra.mxu0 %v680
    %753 = vmatprep.subr.bf16.mxu0 0
    %754 = vmatpush1.bf16.msra.mxu0 %v681
    %755 = vmatprep.subr.bf16.mxu0 0
    %756 = vmatpush1.bf16.msra.mxu0 %v682
    %757 = vmatprep.subr.bf16.mxu0 0
    %758 = vmatpush1.bf16.msra.mxu0 %v683
    %759 = vmatprep.subr.bf16.mxu0 0
    %760 = vmatpush1.bf16.msra.mxu0 %v684
    %761 = vmatprep.subr.bf16.mxu0 0
    %762 = vmatpush1.bf16.msra.mxu0 %v685
    %763 = vmatprep.subr.bf16.mxu0 0
    %764 = vmatpush1.bf16.msra.mxu0 %v686
    %765 = vmatprep.subr.bf16.mxu0 0
    %766 = vmatpush1.bf16.msra.mxu0 %v687
    %767 = vmatprep.subr.bf16.mxu0 0
    %768 = vmatpush1.bf16.msra.mxu0 %v688
    %769 = vmatprep.mubr.bf16.mxu0 %v471
    %770 = vmatmul.mubr.bf16.gmra.mrb[0].mxu0 %v470
    %v771 = vpop.f32.mrb[0].mxu0
    %v772 = vadd.f32 %v543, %v771
    %v773 = vpop.f32.mrb[0].mxu0
    %v774 = vpop.f32.mrb[0].mxu0
    %v775 = vpop.f32.mrb[0].mxu0
    %776 = vdwg.mxu0
    %777 = vmatprep.subr.bf16.mxu0 0
    %778 = vmatpush1.bf16.msra.mxu0 %v689
    %779 = vmatprep.subr.bf16.mxu0 0
    %780 = vmatpush1.bf16.msra.mxu0 %v690
    %781 = vmatprep.subr.bf16.mxu0 0
    %782 = vmatpush1.bf16.msra.mxu0 %v691
    %783 = vmatprep.subr.bf16.mxu0 0
    %784 = vmatpush1.bf16.msra.mxu0 %v692
    %785 = vmatprep.subr.bf16.mxu0 0
    %786 = vmatpush1.bf16.msra.mxu0 %v693
    %787 = vmatprep.subr.bf16.mxu0 0
    %788 = vmatpush1.bf16.msra.mxu0 %v694
    %789 = vmatprep.subr.bf16.mxu0 0
    %790 = vmatpush1.bf16.msra.mxu0 %v695
    %791 = vmatprep.subr.bf16.mxu0 0
    %792 = vmatpush1.bf16.msra.mxu0 %v696
    %793 = vmatprep.subr.bf16.mxu0 0
    %794 = vmatpush1.bf16.msra.mxu0 %v697
    %795 = vmatprep.subr.bf16.mxu0 0
    %796 = vmatpush1.bf16.msra.mxu0 %v698
    %797 = vmatprep.subr.bf16.mxu0 0
    %798 = vmatpush1.bf16.msra.mxu0 %v699
    %799 = vmatprep.subr.bf16.mxu0 0
    %800 = vmatpush1.bf16.msra.mxu0 %v700
    %801 = vmatprep.subr.bf16.mxu0 0
    %802 = vmatpush1.bf16.msra.mxu0 %v701
    %803 = vmatprep.subr.bf16.mxu0 0
    %804 = vmatpush1.bf16.msra.mxu0 %v702
    %805 = vmatprep.subr.bf16.mxu0 0
    %806 = vmatpush1.bf16.msra.mxu0 %v703
    %807 = vmatprep.subr.bf16.mxu0 0
    %808 = vmatpush1.bf16.msra.mxu0 %v704
    %809 = vmatprep.mubr.bf16.mxu0 %v473
    %810 = vmatmul.mubr.bf16.gmra.mrb[0].mxu0 %v472
    %v811 = vpop.f32.mrb[0].mxu0
    %v812 = vadd.f32 %v772, %v811
    %v813 = vpop.f32.mrb[0].mxu0
    %v814 = vpop.f32.mrb[0].mxu0
    %v815 = vpop.f32.mrb[0].mxu0
    %816 = vdwg.mxu0
    %v817 = vmax.f32 %v812, 0.0
    %v818 = vpack.c.bf16 %v817, %v817
    %v819 = vld [vmem:[#allocation10] sm:$0xf]
    %v820 = vld [vmem:[#allocation10 + $0x4] sm:$0xf]
    %v821 = vld [vmem:[#allocation10 + $0x8] sm:$0xf]
    %v822 = vld [vmem:[#allocation10 + $0xc] sm:$0xf]
    %v823 = vld [vmem:[#allocation10 + $0x10] sm:$0xf]
    %v824 = vld [vmem:[#allocation10 + $0x14] sm:$0xf]
    %v825 = vld [vmem:[#allocation10 + $0x18] sm:$0xf]
    %v826 = vld [vmem:[#allocation10 + $0x1c] sm:$0xf]
    %v827 = vld [vmem:[#allocation10 + $0x20] sm:$0xf]
    %v828 = vld [vmem:[#allocation10 + $0x24] sm:$0xf]
    %v829 = vld [vmem:[#allocation10 + $0x28] sm:$0xf]
    %v830 = vld [vmem:[#allocation10 + $0x2c] sm:$0xf]
    %v831 = vld [vmem:[#allocation10 + $0x30] sm:$0xf]
    %v832 = vld [vmem:[#allocation10 + $0x34] sm:$0xf]
    %v833 = vld [vmem:[#allocation10 + $0x38] sm:$0xf]
    %v834 = vld [vmem:[#allocation10 + $0x3c] sm:$0xf]
    %v835 = vld [vmem:[%s8] sm:$0x1]
    %v837 = vlaneseq
    %v838 = vshrl.u32 %v837, 7
    %v839 = vsub.s32 0, %v838
    %v840 = vrot.slane %v835, %v839
    %v858 = vunpack.c.l.b16 %v819
    %v859 = vunpack.c.l.b16 %v820
    %v860 = vunpack.c.l.b16 %v821
    %v861 = vunpack.c.l.b16 %v822
    %v862 = vunpack.c.l.b16 %v823
    %v863 = vunpack.c.l.b16 %v824
    %v864 = vunpack.c.l.b16 %v825
    %v865 = vunpack.c.l.b16 %v826
    %v866 = vunpack.c.l.b16 %v827
    %v867 = vunpack.c.l.b16 %v828
    %v868 = vunpack.c.l.b16 %v829
    %v869 = vunpack.c.l.b16 %v830
    %v870 = vunpack.c.l.b16 %v831
    %v871 = vunpack.c.l.b16 %v832
    %v872 = vunpack.c.l.b16 %v833
    %v873 = vunpack.c.l.b16 %v834
    %v874 = vpack.c.b16 %v859, %v858
    %v875 = vpack.c.b16 %v861, %v860
    %v876 = vpack.c.b16 %v863, %v862
    %v877 = vpack.c.b16 %v865, %v864
    %v878 = vpack.c.b16 %v867, %v866
    %v879 = vpack.c.b16 %v869, %v868
    %v880 = vpack.c.b16 %v871, %v870
    %v881 = vpack.c.b16 %v873, %v872
    %890 = vmatprep.subr.bf16.mxu0 0
    %891 = vmatpush1.bf16.msra.mxu0 %v874
    %892 = vmatprep.subr.bf16.mxu0 0
    %893 = vmatpush1.bf16.msra.mxu0 %v875
    %894 = vmatprep.subr.bf16.mxu0 0
    %895 = vmatpush1.bf16.msra.mxu0 %v876
    %896 = vmatprep.subr.bf16.mxu0 0
    %897 = vmatpush1.bf16.msra.mxu0 %v877
    %898 = vmatprep.subr.bf16.mxu0 0
    %899 = vmatpush1.bf16.msra.mxu0 %v878
    %900 = vmatprep.subr.bf16.mxu0 0
    %901 = vmatpush1.bf16.msra.mxu0 %v879
    %902 = vmatprep.subr.bf16.mxu0 0
    %903 = vmatpush1.bf16.msra.mxu0 %v880
    %904 = vmatprep.subr.bf16.mxu0 0
    %905 = vmatpush1.bf16.msra.mxu0 %v881
    %906 = vmatprep.subr.bf16.mxu0 0
    %907 = vmatpush1.bf16.msra.mxu0 0
    %908 = vmatprep.subr.bf16.mxu0 0
    %909 = vmatpush1.bf16.msra.mxu0 0
    %910 = vmatprep.subr.bf16.mxu0 0
    %911 = vmatpush1.bf16.msra.mxu0 0
    %912 = vmatprep.subr.bf16.mxu0 0
    %913 = vmatpush1.bf16.msra.mxu0 0
    %914 = vmatprep.subr.bf16.mxu0 0
    %915 = vmatpush1.bf16.msra.mxu0 0
    %916 = vmatprep.subr.bf16.mxu0 0
    %917 = vmatpush1.bf16.msra.mxu0 0
    %918 = vmatprep.subr.bf16.mxu0 0
    %919 = vmatpush1.bf16.msra.mxu0 0
    %920 = vmatprep.subr.bf16.mxu0 0
    %921 = vmatpush1.bf16.msra.mxu0 0
    %922 = vmatprep.mubr.bf16.mxu0 0
    %923 = vmatmul.mubr.bf16.gmra.mrb[0].mxu0 %v818
    %v924 = vpop.f32.mrb[0].mxu0
    %v925 = vadd.f32 %v840, %v924
    %v926 = vpop.f32.mrb[0].mxu0
    %v927 = vpop.f32.mrb[0].mxu0
    %v928 = vpop.f32.mrb[0].mxu0
    %929 = vdwg.mxu0
    %v930 = vmul.f32 %v925, 0.5
    %v931 = vtanh.pop %v930
    %v932 = vadd.f32 %v931, 1.0
    %v933 = vmul.f32 %v932, 0.5
    %934 = vst [vmem:[#allocation11] sm:$0xff] %v933
    // Predicated region
    $region58: #{tpu_custom_call.1} parent=1 // pred_check
      _
    $region59: #{tpu_custom_call.1} parent=1 // pred_check_branch
      %936 = sbr.rel (0) target = $region61
    $region60: #{tpu_custom_call.1} parent=1 // pred_region
      %s938 = ssub.s32 128, 128
      %939 = vsyncadd [#allocation4], %s938
      %s941 = sshll.u32 [#allocation11], 4
      %s942 = int_to_ptr.vmem [resolvable:$true] %s941
      %944 = dma.vmem_to_hbm [thread:$0]  %s942, 128, %s9, [#allocation4]
    $region61: #{tpu_custom_call.1} parent=1 // pred_fallthru
      _
    // Predicated region
    $region62: #{tpu_custom_call.1} parent=1 // pred_check
      _
    $region63: #{tpu_custom_call.1} parent=1 // pred_check_branch
      %946 = sbr.rel (0) target = $region65
    $region64: #{tpu_custom_call.1} parent=1 // pred_region
      %947 = dma.done [#allocation4], 128
    $region65: #{tpu_custom_call.1} parent=1 // pred_fallthru
      _
    %948 = vsyncpa [#allocation3], 1
    %949 = vsyncpa [#allocation6], 1
    %950 = vsyncpa [#allocation9], 1
    %951 = vsyncpa [#allocation4], 1

</llo_original>
